<compile_context>
chip_gen: v5e
topology: v5e:2x2
jax: 0.10.0
libtpu: 0.0.40
codegen_flags: <defaults>
</compile_context>

<pallas_src>
import jax
import jax.numpy as jnp
from jax.experimental import pallas as pl
from jax.experimental.pallas import tpu as pltpu


def _se_kernel(x_ref, w1t_ref, w2t_ref, o_ref):
    # x_ref/o_ref: (bt, C, L) storage dtype; w1t_ref: (C, Cr); w2t_ref: (Cr, C)
    x = x_ref[...]

    # Squeeze: mean over the length axis, accumulated in f32.
    y = jnp.mean(x.astype(jnp.float32), axis=-1)                     # (bt, C)

    # Excitation MLP (bias-free) in f32; weights pre-transposed -> no .T here.
    h = jnp.dot(y, w1t_ref[...].astype(jnp.float32),
                preferred_element_type=jnp.float32)                  # (bt, Cr)
    h = jnp.where(h >= 0, h, 0.01 * h)                               # LeakyReLU(0.01)
    s = jnp.dot(h, w2t_ref[...].astype(jnp.float32),
                preferred_element_type=jnp.float32)                  # (bt, C)
    s = jax.nn.sigmoid(s)

    # Scale: broadcast gate over length; multiply/store in the storage dtype.
    gate = s.astype(x.dtype)
    o_ref[...] = (x * gate[:, :, None]).astype(o_ref.dtype)


def _batch_tile(B, C, L, itemsize, vmem_budget_bytes=32 * 1024 * 1024):
    # Input + output tile, each double-buffered => ~4 live tile copies in VMEM.
    per_batch = 4 * C * L * itemsize
    max_bt = max(1, vmem_budget_bytes // per_batch)
    bt = 1
    for d in range(1, int(min(B, max_bt)) + 1):   # largest divisor of B <= max_bt
        if B % d == 0:
            bt = d
    return bt


@jax.jit
def se_layer(x, w1, w2):
    """Squeeze-and-Excitation forward.

    x : (B, C, L)   activations (any float dtype; bf16 recommended for storage)
    w1: (C//r, C)   first Linear weight,  PyTorch (out_features, in_features)
    w2: (C, C//r)   second Linear weight, PyTorch (out_features, in_features)
    returns (B, C, L) with x's dtype.
    """
    B, C, L = x.shape
    Cr = w1.shape[0]
    itemsize = jnp.dtype(x.dtype).itemsize

    bt = _batch_tile(B, C, L, itemsize)
    grid = (B // bt,)

    # Pre-transpose the tiny weights once in the wrapper (no in-kernel relayout).
    w1t = jnp.asarray(w1).T   # (C, Cr)
    w2t = jnp.asarray(w2).T   # (Cr, C)

    weight_bytes = (w1t.size * jnp.dtype(w1t.dtype).itemsize
                    + w2t.size * jnp.dtype(w2t.dtype).itemsize)
    tile_bytes = bt * C * L * itemsize
    vmem_need = 4 * tile_bytes + 2 * weight_bytes + (4 << 20)
    vmem_limit = int(min(max(vmem_need, 32 << 20), 48 << 20))  # v7x-safe (<64 MiB)

    cost = pl.CostEstimate(
        flops=4 * B * C * Cr + 2 * B * C * L,        # two GEMMs + mean + scale
        transcendentals=B * C,                       # sigmoid
        bytes_accessed=2 * B * C * L * itemsize + weight_bytes,
    )

    return pl.pallas_call(
        _se_kernel,
        out_shape=jax.ShapeDtypeStruct((B, C, L), x.dtype),
        grid=grid,
        in_specs=[
            pl.BlockSpec((bt, C, L), lambda i: (i, 0, 0)),
            pl.BlockSpec((C, Cr), lambda i: (0, 0)),   # VMEM-resident weights
            pl.BlockSpec((Cr, C), lambda i: (0, 0)),
        ],
        out_specs=pl.BlockSpec((bt, C, L), lambda i: (i, 0, 0)),
        compiler_params=pltpu.CompilerParams(
            dimension_semantics=("parallel",),
            vmem_limit_bytes=vmem_limit,
        ),
        cost_estimate=cost,
    )(x, w1t, w2t)


def _reference(x, w1, w2):
    y = jnp.mean(x.astype(jnp.float32), axis=-1)
    h = y @ w1.T
    h = jnp.where(h >= 0, h, 0.01 * h)
    s = jax.nn.sigmoid(h @ w2.T)
    return (x.astype(jnp.float32) * s[:, :, None]).astype(x.dtype)


if __name__ == "__main__":
    # Shapes consistent with SELayer(channel=32, reduction=16) on a (B, C, L) input.
    B, C, L = 2, 32, 16
    reduction = 16
    Cr = C // reduction

    key = jax.random.PRNGKey(0)
    kx, k1, k2 = jax.random.split(key, 3)

    x = jax.random.normal(kx, (B, C, L), dtype=jnp.float32)
    # nn.Linear weight shapes: (out_features, in_features), bias-free.
    w1 = jax.random.normal(k1, (Cr, C), dtype=jnp.float32) * (1.0 / jnp.sqrt(C))
    w2 = jax.random.normal(k2, (C, Cr), dtype=jnp.float32) * (1.0 / jnp.sqrt(Cr))

    out = jax.block_until_ready(se_layer(x, w1, w2))
    ref = _reference(x, w1, w2)
    assert out.shape == (B, C, L) and out.dtype == x.dtype
    assert jnp.allclose(out, ref, atol=1e-5, rtol=1e-5)

    # bf16 storage path: squeeze/MLP/sigmoid still run in f32 inside the kernel.
    xb = x.astype(jnp.bfloat16)
    outb = jax.block_until_ready(se_layer(xb, w1, w2))
    assert outb.dtype == jnp.bfloat16
    assert jnp.allclose(outb.astype(jnp.float32), ref, atol=5e-2, rtol=5e-2)

    print("KERNEL_OK")
</pallas_src>

<mosaic_0001>
module attributes {stable_mosaic.version = 11 : i64} {
  func.func @_se_kernel(%arg0: i32, %arg1: memref<2x32x16xf32, #tpu.memory_space<vmem>>, %arg2: memref<32x2xf32, #tpu.memory_space<vmem>>, %arg3: memref<2x32xf32, #tpu.memory_space<vmem>>, %arg4: memref<2x32x16xf32, #tpu.memory_space<vmem>>) attributes {dimension_semantics = [#tpu.dimension_semantics<parallel>], iteration_bounds = array<i64: 1>, scalar_prefetch = 0 : i64, scratch_operands = 0 : i64, tpu.core_type = #tpu.core_type<tc>, window_params = [{transform_indices = @transform_0, window_bounds = array<i64: 2, 32, 16>}, {pipeline_mode = #tpu.pipeline_mode<synchronous>, transform_indices = @transform_1, window_bounds = array<i64: 32, 2>}, {pipeline_mode = #tpu.pipeline_mode<synchronous>, transform_indices = @transform_2, window_bounds = array<i64: 2, 32>}, {transform_indices = @transform_3, window_bounds = array<i64: 2, 32, 16>}]} {
    %c0 = arith.constant 0 : index
    %c0_0 = arith.constant 0 : index
    %c0_1 = arith.constant 0 : index
    %0 = vector.load %arg1[%c0, %c0_0, %c0_1] : memref<2x32x16xf32, #tpu.memory_space<vmem>>, vector<2x32x16xf32>
    %cst = arith.constant dense<0.000000e+00> : vector<2x32xf32>
    %1 = vector.multi_reduction <add>, %0, %cst [2] : vector<2x32x16xf32> to vector<2x32xf32>
    %cst_2 = arith.constant 1.600000e+01 : f32
    %2 = vector.broadcast %cst_2 : f32 to vector<2x32xf32>
    %3 = arith.divf %1, %2 : vector<2x32xf32>
    %c0_3 = arith.constant 0 : index
    %c0_4 = arith.constant 0 : index
    %4 = vector.load %arg2[%c0_3, %c0_4] : memref<32x2xf32, #tpu.memory_space<vmem>>, vector<32x2xf32>
    %cst_5 = arith.constant dense<0.000000e+00> : vector<2x2xf32>
    %5 = tpu.matmul %3, %4, %cst_5 {dimension_numbers = #tpu.dot_dimension_numbers<[1], [0], [0], [1], [0, 0, 1, 1], [], []>} : vector<2x32xf32>, vector<32x2xf32>, vector<2x2xf32> -> vector<2x2xf32>
    %cst_6 = arith.constant 0.000000e+00 : f32
    %6 = vector.broadcast %cst_6 : f32 to vector<2x2xf32>
    %7 = arith.cmpf oge, %5, %6 : vector<2x2xf32>
    %cst_7 = arith.constant 0.00999999977 : f32
    %8 = vector.broadcast %cst_7 : f32 to vector<2x2xf32>
    %9 = arith.mulf %8, %5 : vector<2x2xf32>
    %10 = arith.select %7, %5, %9 : vector<2x2xi1>, vector<2x2xf32>
    %c0_8 = arith.constant 0 : index
    %c0_9 = arith.constant 0 : index
    %11 = vector.load %arg3[%c0_8, %c0_9] : memref<2x32xf32, #tpu.memory_space<vmem>>, vector<2x32xf32>
    %cst_10 = arith.constant dense<0.000000e+00> : vector<2x32xf32>
    %12 = tpu.matmul %10, %11, %cst_10 {dimension_numbers = #tpu.dot_dimension_numbers<[1], [0], [0], [1], [0, 0, 1, 1], [], []>} : vector<2x2xf32>, vector<2x32xf32>, vector<2x32xf32> -> vector<2x32xf32>
    %13 = arith.negf %12 : vector<2x32xf32>
    %14 = math.exp %13 : vector<2x32xf32>
    %cst_11 = arith.constant 1.000000e+00 : f32
    %15 = vector.broadcast %cst_11 : f32 to vector<2x32xf32>
    %16 = arith.addf %15, %14 : vector<2x32xf32>
    %17 = arith.divf %15, %16 : vector<2x32xf32>
    %18 = vector.shape_cast %17 : vector<2x32xf32> to vector<2x32x1xf32>
    %19 = vector.broadcast %18 : vector<2x32x1xf32> to vector<2x32x16xf32>
    %20 = arith.mulf %0, %19 : vector<2x32x16xf32>
    %c0_12 = arith.constant 0 : index
    %c0_13 = arith.constant 0 : index
    %c0_14 = arith.constant 0 : index
    %21 = vector.load %arg4[%c0_12, %c0_13, %c0_14] : memref<2x32x16xf32, #tpu.memory_space<vmem>>, vector<2x32x16xf32>
    tpu.vector_store %arg4[%c0_12, %c0_13, %c0_14], %20 {strides = array<i32>} : memref<2x32x16xf32, #tpu.memory_space<vmem>>, vector<2x32x16xf32>,
    return
  }
  func.func @transform_0(%arg0: i32) -> (i32, i32, i32) {
    %c0_i32 = arith.constant 0 : i32
    %c0_i32_0 = arith.constant 0 : i32
    %c0_i32_1 = arith.constant 0 : i32
    return %arg0, %c0_i32, %c0_i32_0 : i32, i32, i32
  }
  func.func @transform_1(%arg0: i32) -> (i32, i32) {
    %c0_i32 = arith.constant 0 : i32
    %c0_i32_0 = arith.constant 0 : i32
    %c0_i32_1 = arith.constant 0 : i32
    return %c0_i32, %c0_i32_0 : i32, i32
  }
  func.func @transform_2(%arg0: i32) -> (i32, i32) {
    %c0_i32 = arith.constant 0 : i32
    %c0_i32_0 = arith.constant 0 : i32
    %c0_i32_1 = arith.constant 0 : i32
    return %c0_i32, %c0_i32_0 : i32, i32
  }
  func.func @transform_3(%arg0: i32) -> (i32, i32, i32) {
    %c0_i32 = arith.constant 0 : i32
    %c0_i32_0 = arith.constant 0 : i32
    %c0_i32_1 = arith.constant 0 : i32
    return %arg0, %c0_i32, %c0_i32_0 : i32, i32, i32
  }
}

</mosaic_0001>

<llo_original>
// kernel: se_layer.1
$region0: #{se_layer.1}
  #allocation0 [shape = 'u32[]', space=smem, size = 0x4, offset = 0x4, fixed_abs, tag = 'smem constant byte address 0x4 - core index']
  #allocation1 [shape = 'u32[72,128]{1,0:T(1,128)}', space=vmem, size = 0x9000, scoped, tag = 'internal scratch']
  %s0 = inlined_call_operand.vmem [shape: f32[2,32,16], index: 0, kind: input, shape index: {}]
  %s1 = inlined_call_operand.vmem [shape: f32[32,2], index: 1, kind: input, shape index: {}]
  %s2 = inlined_call_operand.vmem [shape: f32[2,32], index: 2, kind: input, shape index: {}]
  %s3 = inlined_call_operand.vmem [shape: f32[2,32,16], index: 3, kind: output, shape index: {}]
  %s4 = sld [smem:[#allocation0]]
  $region22: #{se_layer.1} parent=0
    _
  %s6 = ssub.s32 1, %s4
  %s7 = scalar_select 0, %s6, %s4
  // Predicated region
  $region2: #{se_layer.1} parent=0 // pred_check
    _
  $region3: #{se_layer.1} parent=0 // pred_check_branch
    %9 = sbr.rel (0) target = $region5
  $region4: #{se_layer.1} parent=0 // pred_region
    _
  $region5: #{se_layer.1} parent=0 // pred_fallthru
    _
  // Predicated region
  $region6: #{se_layer.1} parent=0 // pred_check
    _
  $region7: #{se_layer.1} parent=0 // pred_check_branch
    %11 = sbr.rel (0) target = $region9
  $region8: #{se_layer.1} parent=0 // pred_region
    _
  $region9: #{se_layer.1} parent=0 // pred_fallthru
    _
  // Predicated region
  $region10: #{se_layer.1} parent=0 // pred_check
    _
  $region11: #{se_layer.1} parent=0 // pred_check_branch
    %13 = sbr.rel (0) target = $region13
  $region12: #{se_layer.1} parent=0 // pred_region
    _
  $region13: #{se_layer.1} parent=0 // pred_fallthru
    _
  %v14 = vld [vmem:[%s0] sm:$0xff]
  %v15 = vld [vmem:[%s0 + $0x8] sm:$0xff]
  %v16 = vld [vmem:[%s0 + $0x10] sm:$0xff]
  %v17 = vld [vmem:[%s0 + $0x18] sm:$0xff]
  %v18 = vld [vmem:[%s0 + $0x20] sm:$0xff]
  %v19 = vld [vmem:[%s0 + $0x28] sm:$0xff]
  %v20 = vld [vmem:[%s0 + $0x30] sm:$0xff]
  %v21 = vld [vmem:[%s0 + $0x38] sm:$0xff]
  %vm22 = vcmask 130048
  %v23 = vsel %vm22, %v14, 0.0
  %24 = vadd.xlane.f32.xlu0 %v23
  %v25 = vpop.xlane.xlu0 %24
  %v26 = vsel %vm22, %v15, 0.0
  %27 = vadd.xlane.f32.xlu0 %v26
  %v28 = vpop.xlane.xlu0 %27
  %v29 = vsel %vm22, %v16, 0.0
  %30 = vadd.xlane.f32.xlu0 %v29
  %v31 = vpop.xlane.xlu0 %30
  %v32 = vsel %vm22, %v17, 0.0
  %33 = vadd.xlane.f32.xlu0 %v32
  %v34 = vpop.xlane.xlu0 %33
  %v35 = vsel %vm22, %v18, 0.0
  %36 = vadd.xlane.f32.xlu0 %v35
  %v37 = vpop.xlane.xlu0 %36
  %v38 = vsel %vm22, %v19, 0.0
  %39 = vadd.xlane.f32.xlu0 %v38
  %v40 = vpop.xlane.xlu0 %39
  %v41 = vsel %vm22, %v20, 0.0
  %42 = vadd.xlane.f32.xlu0 %v41
  %v43 = vpop.xlane.xlu0 %42
  %v44 = vsel %vm22, %v21, 0.0
  %45 = vadd.xlane.f32.xlu0 %v44
  %v46 = vpop.xlane.xlu0 %45
  %v47 = vrcp.pop 16.0
  %v48 = vmul.f32 16.0, %v47
  %v49 = vsub.f32 1.0, %v48
  %v50 = vmul.f32 %v47, %v49
  %v51 = vadd.f32 %v47, %v50
  %vm52 = vweird.f32 %v47
  %v53 = vsel %vm52, %v47, %v51
  %v54 = vmul.f32 %v25, %v53
  %v55 = vmul.f32 %v28, %v53
  %v56 = vmul.f32 %v31, %v53
  %v57 = vmul.f32 %v34, %v53
  %v58 = vmul.f32 %v37, %v53
  %v59 = vmul.f32 %v40, %v53
  %v60 = vmul.f32 %v43, %v53
  %v61 = vmul.f32 %v46, %v53
  %v62 = vld [vmem:[%s1] sm:$0xff]
  %v63 = vld [vmem:[%s1 + $0x8] sm:$0xff]
  %v64 = vld [vmem:[%s1 + $0x10] sm:$0xff]
  %v65 = vld [vmem:[%s1 + $0x18] sm:$0xff]
  %v74 = vlaneseq
  %v75 = vand.u32 %v74, 127
  %v76 = vperm.slane %v54, %v75
  %v77 = vadd.s32 %v75, 4294967288
  %v78 = vperm.slane %v55, %v77
  %vm79 = vcmask 130112
  %v80 = vsel %vm79, %v78, %v76
  %v81 = vadd.s32 %v75, 4294967280
  %v82 = vperm.slane %v56, %v81
  %vm83 = vcmask 195712
  %v84 = vsel %vm83, %v82, %v80
  %v85 = vadd.s32 %v75, 4294967272
  %v86 = vperm.slane %v57, %v85
  %vm87 = vcmask 261312
  %v88 = vsel %vm87, %v86, %v84
  %v89 = vperm.slane %v58, %v75
  %v90 = vperm.slane %v59, %v77
  %v91 = vsel %vm79, %v90, %v89
  %v92 = vperm.slane %v60, %v81
  %v93 = vsel %vm83, %v92, %v91
  %v94 = vperm.slane %v61, %v85
  %v95 = vsel %vm87, %v94, %v93
  %vm96 = vcmask 1041409
  %v97 = vsel %vm96, %v95, %v88
  %vm98 = vcmask 261120
  %v99 = vsel %vm98, %v97, 0
  %101 = vmatpush.msra.mxu0 0.0
  %102 = vmatpush.msra.mxu0 0.0
  %103 = vmatpush.msra.mxu0 0.0
  %104 = vmatpush.msra.mxu0 0.0
  %105 = vmatpush.msra.mxu0 0.0
  %106 = vmatpush.msra.mxu0 0.0
  %107 = vmatpush.msra.mxu0 0.0
  %108 = vmatpush.msra.mxu0 0.0
  %109 = vmatpush.msra.mxu0 0.0
  %110 = vmatpush.msra.mxu0 0.0
  %111 = vmatpush.msra.mxu0 0.0
  %112 = vmatpush.msra.mxu0 0.0
  %113 = vmatpush.msra.mxu0 %v65
  %114 = vmatpush.msra.mxu0 %v64
  %115 = vmatpush.msra.mxu0 %v63
  %116 = vmatpush.msra.mxu0 %v62
  %117 = vmatmul.f32.gmra.mxu0 %v99
  %v118 = vpop.f32.mrf.mxu0
  %v119 = vadd.f32 0.0, %v118
  %120 = vdwg.mxu0
  %vm121 = vcmp.ge.f32.partialorder %v119, 0.0
  %v122 = vmul.f32 %v119, 0.01
  %v123 = vsel %vm121, %v119, %v122
  %v124 = vld [vmem:[%s2] sm:$0x3]
  %vm125 = vcmask 15360
  %v127 = vsel %vm125, %v123, 0
  %vm129 = vcmask 1041408
  %v131 = vsel %vm129, %v124, 0
  %133 = vmatpush.msra.mxu0 0.0
  %134 = vmatpush.msra.mxu0 0.0
  %135 = vmatpush.msra.mxu0 0.0
  %136 = vmatpush.msra.mxu0 0.0
  %137 = vmatpush.msra.mxu0 0.0
  %138 = vmatpush.msra.mxu0 0.0
  %139 = vmatpush.msra.mxu0 0.0
  %140 = vmatpush.msra.mxu0 0.0
  %141 = vmatpush.msra.mxu0 0.0
  %142 = vmatpush.msra.mxu0 0.0
  %143 = vmatpush.msra.mxu0 0.0
  %144 = vmatpush.msra.mxu0 0.0
  %145 = vmatpush.msra.mxu0 0.0
  %146 = vmatpush.msra.mxu0 0.0
  %147 = vmatpush.msra.mxu0 0.0
  %148 = vmatpush.msra.mxu0 %v131
  %149 = vmatmul.f32.gmra.mxu0 %v127
  %v150 = vpop.f32.mrf.mxu0
  %v151 = vadd.f32 0.0, %v150
  %152 = vdwg.mxu0
  %v153 = vxor.u32 %v151, 2147483648
  %v154 = vmul.f32 %v153, 1.442695
  %v155 = vpow.pop %v154
  %v156 = vadd.f32 %v155, 1.0
  %v157 = vrcp.pop %v156
  %v158 = vmul.f32 %v156, %v157
  %v159 = vsub.f32 1.0, %v158
  %v160 = vmul.f32 %v157, %v159
  %v161 = vadd.f32 %v157, %v160
  %vm162 = vweird.f32 %v156
  %vm163 = vweird.f32 %v157
  %vm164 = vmor %vm162, %vm163
  %v165 = vsel %vm164, %v157, %v161
  %v166 = vand.u32 2147483647, %v156
  %vm167 = vcmp.eq.f32.partialorder %v166, 8.507059e+37
  %v168 = vand.u32 %v156, 2147483648
  %v169 = vor.u32 1.1754944e-38, %v168
  %v170 = vsel %vm167, %v169, %v165
  %v171 = vmul.f32 1.0, %v170
  %v172 = vperm.slane %v171, 0
  %v173 = vlaneseq
  %v174 = vshrl.u32 %v173, 7
  %176 = vset.pattern.permute.xlu0 %v174
  %177 = vperm.xlu0 %176, %v172
  %v178 = vpop.permute.xlu0 %177
  %v179 = vlaneseq
  %v180 = vshrl.u32 %v179, 7
  %v181 = vadd.s32 %v180, 8
  %182 = vset.pattern.permute.xlu0 %v181
  %183 = vperm.xlu0 %182, %v172
  %v184 = vpop.permute.xlu0 %183
  %v185 = vlaneseq
  %v186 = vshrl.u32 %v185, 7
  %v187 = vadd.s32 %v186, 16
  %188 = vset.pattern.permute.xlu0 %v187
  %189 = vperm.xlu0 %188, %v172
  %v190 = vpop.permute.xlu0 %189
  %v191 = vlaneseq
  %v192 = vshrl.u32 %v191, 7
  %v193 = vadd.s32 %v192, 24
  %194 = vset.pattern.permute.xlu0 %v193
  %195 = vperm.xlu0 %194, %v172
  %v196 = vpop.permute.xlu0 %195
  %v197 = vperm.slane %v171, 1
  %v198 = vlaneseq
  %v199 = vshrl.u32 %v198, 7
  %201 = vset.pattern.permute.xlu0 %v199
  %202 = vperm.xlu0 %201, %v197
  %v203 = vpop.permute.xlu0 %202
  %v204 = vlaneseq
  %v205 = vshrl.u32 %v204, 7
  %v206 = vadd.s32 %v205, 8
  %207 = vset.pattern.permute.xlu0 %v206
  %208 = vperm.xlu0 %207, %v197
  %v209 = vpop.permute.xlu0 %208
  %v210 = vlaneseq
  %v211 = vshrl.u32 %v210, 7
  %v212 = vadd.s32 %v211, 16
  %213 = vset.pattern.permute.xlu0 %v212
  %214 = vperm.xlu0 %213, %v197
  %v215 = vpop.permute.xlu0 %214
  %v216 = vlaneseq
  %v217 = vshrl.u32 %v216, 7
  %v218 = vadd.s32 %v217, 24
  %219 = vset.pattern.permute.xlu0 %v218
  %220 = vperm.xlu0 %219, %v197
  %v221 = vpop.permute.xlu0 %220
  %v222 = vmul.f32 %v14, %v178
  %v223 = vmul.f32 %v15, %v184
  %v224 = vmul.f32 %v16, %v190
  %v225 = vmul.f32 %v17, %v196
  %v226 = vmul.f32 %v18, %v203
  %v227 = vmul.f32 %v19, %v209
  %v228 = vmul.f32 %v20, %v215
  %v229 = vmul.f32 %v21, %v221
  %230 = vst.msk [vmem:[%s3] sm:$0xff] %vm22, %v222
  %231 = vst.msk [vmem:[%s3 + $0x8] sm:$0xff] %vm22, %v223
  %232 = vst.msk [vmem:[%s3 + $0x10] sm:$0xff] %vm22, %v224
  %233 = vst.msk [vmem:[%s3 + $0x18] sm:$0xff] %vm22, %v225
  %234 = vst.msk [vmem:[%s3 + $0x20] sm:$0xff] %vm22, %v226
  %235 = vst.msk [vmem:[%s3 + $0x28] sm:$0xff] %vm22, %v227
  %236 = vst.msk [vmem:[%s3 + $0x30] sm:$0xff] %vm22, %v228
  %237 = vst.msk [vmem:[%s3 + $0x38] sm:$0xff] %vm22, %v229
  // Predicated region
  $region14: #{se_layer.1} parent=0 // pred_check
    _
  $region15: #{se_layer.1} parent=0 // pred_check_branch
    %239 = sbr.rel (0) target = $region17
  $region16: #{se_layer.1} parent=0 // pred_region
    _
  $region17: #{se_layer.1} parent=0 // pred_fallthru
    _
  // Predicated region
  $region18: #{se_layer.1} parent=0 // pred_check
    _
  $region19: #{se_layer.1} parent=0 // pred_check_branch
    %241 = sbr.rel (0) target = $region21
  $region20: #{se_layer.1} parent=0 // pred_region
    _
  $region21: #{se_layer.1} parent=0 // pred_fallthru
    _

</llo_original>
